<compile_context>
chip_gen: v7x
topology: tpu7x:2x2x1
jax: 0.10.0
libtpu: 0.0.40
codegen_flags: <defaults>
</compile_context>

<pallas_src>
import functools

import jax
import jax.numpy as jnp
from jax.experimental import pallas as pl
from jax.experimental.pallas import tpu as pltpu


def _round_up(x, m):
    return ((x + m - 1) // m) * m


def _vmem_budget_bytes():
    """Conservative per-core VMEM budget (leaves headroom for compiler scratch)."""
    cap = 64 * 1024 * 1024  # v7x physical VMEM per TensorCore (smallest of the gens)
    try:
        info = pltpu.get_tpu_info()
        cap = int(getattr(info, "vmem_capacity_bytes", cap))
    except Exception:
        pass
    return int(cap * 3 // 4)


def _kernel_w_stationary(x_ref, w_ref, o_ref, winv_ref, *, eps, mxu_dtype):
    """grid = (n_blocks, m_blocks); weight block resident across the inner axis."""
    @pl.when(pl.program_id(1) == 0)
    def _():
        wf = w_ref[...].astype(jnp.float32)
        sw = jnp.sum(wf * wf, axis=0, keepdims=True)            # (1, tn)
        winv_ref[...] = jax.lax.rsqrt(jnp.maximum(sw, eps * eps))

    x = x_ref[...]
    xf = x.astype(jnp.float32)
    sx = jnp.sum(xf * xf, axis=1, keepdims=True)                 # (tm, 1)
    x_inv = jax.lax.rsqrt(jnp.maximum(sx, eps * eps))

    prod = jnp.dot(x.astype(mxu_dtype), w_ref[...].astype(mxu_dtype),
                   preferred_element_type=jnp.float32)           # (tm, tn)
    o_ref[...] = (prod * x_inv * winv_ref[...]).astype(o_ref.dtype)


def _kernel_x_stationary(x_ref, w_ref, o_ref, xinv_ref, *, eps, mxu_dtype):
    """grid = (m_blocks, n_blocks); x block resident across the inner axis."""
    @pl.when(pl.program_id(1) == 0)
    def _():
        xf = x_ref[...].astype(jnp.float32)
        sx = jnp.sum(xf * xf, axis=1, keepdims=True)             # (tm, 1)
        xinv_ref[...] = jax.lax.rsqrt(jnp.maximum(sx, eps * eps))

    w = w_ref[...]
    wf = w.astype(jnp.float32)
    sw = jnp.sum(wf * wf, axis=0, keepdims=True)                 # (1, tn)
    w_inv = jax.lax.rsqrt(jnp.maximum(sw, eps * eps))

    prod = jnp.dot(x_ref[...].astype(mxu_dtype), w.astype(mxu_dtype),
                   preferred_element_type=jnp.float32)           # (tm, tn)
    o_ref[...] = (prod * xinv_ref[...] * w_inv).astype(o_ref.dtype)


def normed_classifier(x, weight, *, eps=1e-12, block_m=512, block_n=512,
                      mxu_dtype=None):
    """Forward of NormedClassifier.

    x:      (N, d_in)
    weight: (d_in, n_class)
    returns (N, n_class) == F.normalize(x, dim=1) @ F.normalize(weight, dim=0)
    """
    m, d_in = x.shape
    d_in_w, n_class = weight.shape
    assert d_in == d_in_w

    out_dtype = x.dtype
    if mxu_dtype is None:
        # Native bf16 MXU path only when the caller already hands us bf16;
        # f32 inputs keep an f32 matmul so results match PyTorch tightly.
        mxu_dtype = (jnp.bfloat16
                     if (x.dtype == jnp.bfloat16 and weight.dtype == jnp.bfloat16)
                     else jnp.float32)

    x_isz = jnp.dtype(x.dtype).itemsize
    w_isz = jnp.dtype(weight.dtype).itemsize
    o_isz = jnp.dtype(out_dtype).itemsize

    # Lane/sublane-dense padding: N -> multiple of 8, n_class -> multiple of 128,
    # even when smaller than the block sizes (unmasked stores, full MXU N dim).
    m_pad = max(_round_up(m, 8), 8)
    n_pad = max(_round_up(n_class, 128), 128)

    # Tile sizes: biggest that fits the (generation-aware) VMEM budget after
    # double-buffering both inputs and the output.
    budget = _vmem_budget_bytes()
    tm = min(_round_up(min(block_m, m_pad), 8), m_pad)
    tn = min(_round_up(min(block_n, n_pad), 128), n_pad)

    def vmem_bytes(tm_, tn_):
        return (2 * (tm_ * d_in * x_isz + d_in * tn_ * w_isz + tm_ * tn_ * o_isz)
                + 4 * (tm_ + tn_) + (1 << 20))  # norm scratch + slack

    while vmem_bytes(tm, tn) > budget and (tm > 8 or tn > 128):
        if tm >= tn and tm > 8:
            tm = max(8, _round_up(tm // 2, 8))
        elif tn > 128:
            tn = max(128, _round_up(tn // 2, 128))
        else:
            tm = max(8, _round_up(tm // 2, 8))
    # TODO(synk): if d_in alone blows the VMEM budget, add a K grid axis with a
    # VMEM accumulator and per-block partial sums of squares.

    m_pad = _round_up(m_pad, tm)
    n_pad = _round_up(n_pad, tn)

    xp = x if m_pad == m else jnp.pad(x, ((0, m_pad - m), (0, 0)))
    wp = weight if n_pad == n_class else jnp.pad(weight, ((0, 0), (0, n_pad - n_class)))

    m_blocks = m_pad // tm
    n_blocks = n_pad // tn

    # Make the larger operand stationary (DMA'd once; index_map depends only on
    # the outer axis); the smaller operand streams along the inner axis.
    weight_stationary = (d_in * n_pad * w_isz) >= (m_pad * d_in * x_isz)

    if weight_stationary:
        grid = (n_blocks, m_blocks)                       # outer: classes, inner: rows
        x_spec = pl.BlockSpec((tm, d_in), lambda j, i: (i, 0))
        w_spec = pl.BlockSpec((d_in, tn), lambda j, i: (0, j))
        o_spec = pl.BlockSpec((tm, tn), lambda j, i: (i, j))
        scratch = pltpu.VMEM((1, tn), jnp.float32)        # cached 1/||w_col||
        kernel = functools.partial(_kernel_w_stationary, eps=eps, mxu_dtype=mxu_dtype)
    else:
        grid = (m_blocks, n_blocks)                       # outer: rows, inner: classes
        x_spec = pl.BlockSpec((tm, d_in), lambda i, j: (i, 0))
        w_spec = pl.BlockSpec((d_in, tn), lambda i, j: (0, j))
        o_spec = pl.BlockSpec((tm, tn), lambda i, j: (i, j))
        scratch = pltpu.VMEM((tm, 1), jnp.float32)        # cached 1/||x_row||
        kernel = functools.partial(_kernel_x_stationary, eps=eps, mxu_dtype=mxu_dtype)

    out = pl.pallas_call(
        kernel,
        out_shape=jax.ShapeDtypeStruct((m_pad, n_pad), out_dtype),
        grid_spec=pltpu.PrefetchScalarGridSpec(
            num_scalar_prefetch=0,
            grid=grid,
            in_specs=[x_spec, w_spec],
            out_specs=o_spec,
            scratch_shapes=[scratch],
        ),
        compiler_params=pltpu.CompilerParams(
            # Outer axis may be sharded across TensorCores (v7x); inner axis must
            # stay sequential because the stationary norm is cached at inner == 0.
            dimension_semantics=("parallel", "arbitrary"),
            vmem_limit_bytes=int(budget),
        ),
    )(xp, wp)

    if m_pad != m or n_pad != n_class:
        out = out[:m, :n_class]
    return out


def _reference_forward(x, weight, eps=1e-12):
    """Pure-JAX reference of F.normalize(x, dim=1) @ F.normalize(w, dim=0)."""
    xn = x / jnp.maximum(jnp.linalg.norm(x, axis=1, keepdims=True), eps)
    wn = weight / jnp.maximum(jnp.linalg.norm(weight, axis=0, keepdims=True), eps)
    return xn @ wn


if __name__ == "__main__":
    key = jax.random.PRNGKey(0)
    kx, kw = jax.random.split(key, 2)

    # NormedClassifier(d_in=32, n_class=16), batch of 8.
    N, D_IN, N_CLASS = 8, 32, 16

    x = jax.random.normal(kx, (N, D_IN), dtype=jnp.float32)

    # Mimic the module's init: uniform(-1,1).renorm_(2, 1, 1e-5).mul_(1e5)
    w = jax.random.uniform(kw, (D_IN, N_CLASS), jnp.float32, -1.0, 1.0)
    col_norm = jnp.linalg.norm(w, axis=0, keepdims=True)
    w = w * jnp.minimum(1.0, 1e-5 / jnp.maximum(col_norm, 1e-20)) * 1e5

    expected = _reference_forward(x, w)

    # Default (f32 inputs -> f32 MXU): matches the PyTorch forward tightly.
    out = jax.block_until_ready(normed_classifier(x, w))
    assert out.shape == (N, N_CLASS), out.shape
    assert jnp.allclose(out, expected, atol=1e-4, rtol=1e-4), \
        float(jnp.max(jnp.abs(out - expected)))

    # Optional bf16-MXU path (native MXU throughput; looser tolerance).
    out_bf16 = jax.block_until_ready(
        normed_classifier(x, w, mxu_dtype=jnp.bfloat16))
    assert jnp.allclose(out_bf16, expected, atol=3e-2, rtol=3e-2), \
        float(jnp.max(jnp.abs(out_bf16 - expected)))

    print("KERNEL_OK")
</pallas_src>

<mosaic_0001>
module attributes {stable_mosaic.version = 11 : i64} {
  func.func @_kernel_w_stationary(%arg0: i32, %arg1: i32, %arg2: memref<8x32xf32, #tpu.memory_space<vmem>>, %arg3: memref<32x128xf32, #tpu.memory_space<vmem>>, %arg4: memref<8x128xf32, #tpu.memory_space<vmem>>, %arg5: memref<1x128xf32, #tpu.memory_space<vmem>>) attributes {dimension_semantics = [#tpu.dimension_semantics<parallel>, #tpu.dimension_semantics<arbitrary>], iteration_bounds = array<i64: 1, 1>, scalar_prefetch = 0 : i64, scratch_operands = 1 : i64, tpu.core_type = #tpu.core_type<tc>, window_params = [{transform_indices = @transform_0, window_bounds = array<i64: 8, 32>}, {transform_indices = @transform_1, window_bounds = array<i64: 32, 128>}, {transform_indices = @transform_2, window_bounds = array<i64: 8, 128>}]} {
    %c0_i32 = arith.constant 0 : i32
    %0 = arith.cmpi eq, %arg1, %c0_i32 : i32
    %1 = arith.extui %0 : i1 to i32
    %c0_i32_0 = arith.constant 0 : i32
    %2 = arith.cmpi ne, %1, %c0_i32_0 : i32
    scf.if %2 {
      %c0_10 = arith.constant 0 : index
      %c0_11 = arith.constant 0 : index
      %18 = vector.load %arg3[%c0_10, %c0_11] : memref<32x128xf32, #tpu.memory_space<vmem>>, vector<32x128xf32>
      %19 = arith.mulf %18, %18 : vector<32x128xf32>
      %cst_12 = arith.constant dense<0.000000e+00> : vector<128xf32>
      %20 = vector.multi_reduction <add>, %19, %cst_12 [0] : vector<32x128xf32> to vector<128xf32>
      %21 = vector.shape_cast %20 : vector<128xf32> to vector<1x128xf32>
      %cst_13 = arith.constant 1.000000e-24 : f32
      %22 = vector.broadcast %cst_13 : f32 to vector<1x128xf32>
      %23 = arith.maximumf %21, %22 : vector<1x128xf32>
      %24 = math.rsqrt %23 : vector<1x128xf32>
      %c0_14 = arith.constant 0 : index
      %c0_15 = arith.constant 0 : index
      %25 = vector.load %arg5[%c0_14, %c0_15] : memref<1x128xf32, #tpu.memory_space<vmem>>, vector<1x128xf32>
      tpu.vector_store %arg5[%c0_14, %c0_15], %24 {strides = array<i32>} : memref<1x128xf32, #tpu.memory_space<vmem>>, vector<1x128xf32>,
    } else {
    }
    %c0 = arith.constant 0 : index
    %c0_1 = arith.constant 0 : index
    %3 = vector.load %arg2[%c0, %c0_1] : memref<8x32xf32, #tpu.memory_space<vmem>>, vector<8x32xf32>
    %4 = arith.mulf %3, %3 : vector<8x32xf32>
    %cst = arith.constant dense<0.000000e+00> : vector<8xf32>
    %5 = vector.multi_reduction <add>, %4, %cst [1] : vector<8x32xf32> to vector<8xf32>
    %6 = vector.shape_cast %5 : vector<8xf32> to vector<8x1xf32>
    %cst_2 = arith.constant 1.000000e-24 : f32
    %7 = vector.broadcast %cst_2 : f32 to vector<8x1xf32>
    %8 = arith.maximumf %6, %7 : vector<8x1xf32>
    %9 = math.rsqrt %8 : vector<8x1xf32>
    %c0_3 = arith.constant 0 : index
    %c0_4 = arith.constant 0 : index
    %10 = vector.load %arg3[%c0_3, %c0_4] : memref<32x128xf32, #tpu.memory_space<vmem>>, vector<32x128xf32>
    %cst_5 = arith.constant dense<0.000000e+00> : vector<8x128xf32>
    %11 = tpu.matmul %3, %10, %cst_5 {dimension_numbers = #tpu.dot_dimension_numbers<[1], [0], [0], [1], [0, 0, 1, 1], [], []>} : vector<8x32xf32>, vector<32x128xf32>, vector<8x128xf32> -> vector<8x128xf32>
    %12 = vector.broadcast %9 : vector<8x1xf32> to vector<8x128xf32>
    %13 = arith.mulf %11, %12 : vector<8x128xf32>
    %c0_6 = arith.constant 0 : index
    %c0_7 = arith.constant 0 : index
    %14 = vector.load %arg5[%c0_6, %c0_7] : memref<1x128xf32, #tpu.memory_space<vmem>>, vector<1x128xf32>
    %15 = vector.broadcast %14 : vector<1x128xf32> to vector<8x128xf32>
    %16 = arith.mulf %13, %15 : vector<8x128xf32>
    %c0_8 = arith.constant 0 : index
    %c0_9 = arith.constant 0 : index
    %17 = vector.load %arg4[%c0_8, %c0_9] : memref<8x128xf32, #tpu.memory_space<vmem>>, vector<8x128xf32>
    tpu.vector_store %arg4[%c0_8, %c0_9], %16 {strides = array<i32>} : memref<8x128xf32, #tpu.memory_space<vmem>>, vector<8x128xf32>,
    return
  }
  func.func @transform_0(%arg0: i32, %arg1: i32) -> (i32, i32) {
    %c0_i32 = arith.constant 0 : i32
    %c0_i32_0 = arith.constant 0 : i32
    return %arg1, %c0_i32 : i32, i32
  }
  func.func @transform_1(%arg0: i32, %arg1: i32) -> (i32, i32) {
    %c0_i32 = arith.constant 0 : i32
    %c0_i32_0 = arith.constant 0 : i32
    return %c0_i32, %arg0 : i32, i32
  }
  func.func @transform_2(%arg0: i32, %arg1: i32) -> (i32, i32) {
    %c0_i32 = arith.constant 0 : i32
    return %arg1, %arg0 : i32, i32
  }
}

</mosaic_0001>

<llo_original>
// kernel: tpu_custom_call.1
$region0: #{tpu_custom_call.1}
  #allocation0 [shape = 'u32[]', space=smem, size = 0x4, offset = 0x4, fixed_abs, tag = 'smem constant byte address 0x4 - core index']
  #allocation1 [shape = 'u32[144,128]{1,0:T(1,128)}', space=vmem, size = 0x12000, scoped, tag = 'internal scratch']
  #allocation2 [shape = 'f32[1,128]{1,0:T(1,128)}', space=vmem, size = 0x200, scoped, tag = 'scratch operand']
  %s0 = inlined_call_operand.hbm [shape: f32[8,32], index: 0, kind: input, shape index: {}]
  %s1 = inlined_call_operand.hbm [shape: f32[32,128], index: 1, kind: input, shape index: {}]
  %s2 = inlined_call_operand.hbm [shape: f32[8,128], index: 2, kind: output, shape index: {}]
  %s3 = sld [smem:[#allocation0]]
  $region30: #{tpu_custom_call.1} parent=0
    _
  %s5 = ssub.s32 1, %s3
  %s6 = scalar_select 0, %s5, %s3
  $region1: #{tpu_custom_call.1} parent=0
    #allocation3 [shape = 'u8[4096]{0}', space=vmem, size = 0x1000, scoped, tag = 'input window, operand 0, single buffered']
    #allocation4 [shape = 's32[1]{0}', space=sflag, size = 0x4, scoped, tag = 'scoped memory for tpu_custom_call.1']
    #allocation5 [shape = 's32[1]{0}', space=sflag, size = 0x4, scoped, tag = 'scoped memory for tpu_custom_call.1']
    #allocation6 [shape = 'u8[16384]{0}', space=vmem, size = 0x4000, scoped, tag = 'input window, operand 1, single buffered']
    #allocation7 [shape = 's32[1]{0}', space=sflag, size = 0x4, scoped, tag = 'scoped memory for tpu_custom_call.1']
    #allocation8 [shape = 'u8[4096]{0}', space=vmem, size = 0x1000, scoped, tag = 'output window, operand 0, single buffered']
    %7 = vsyncpa [#allocation4], 0
    %8 = vsyncpa [#allocation7], 0
    %9 = vsyncpa [#allocation5], 0
    // Predicated region
    $region2: #{tpu_custom_call.1} parent=1 // pred_check
      _
    $region3: #{tpu_custom_call.1} parent=1 // pred_check_branch
      %11 = sbr.rel (0) target = $region5
    $region4: #{tpu_custom_call.1} parent=1 // pred_region
      %s13 = ssub.s32 128, 128
      %14 = vsyncadd [#allocation4], %s13
      %s16 = sshll.u32 [#allocation3], 4
      %s17 = int_to_ptr.vmem [resolvable:$true] %s16
      %19 = dma.hbm_to_vmem [thread:$0]  %s0, 128, %s17, [#allocation4]
    $region5: #{tpu_custom_call.1} parent=1 // pred_fallthru
      _
    // Predicated region
    $region6: #{tpu_custom_call.1} parent=1 // pred_check
      _
    $region7: #{tpu_custom_call.1} parent=1 // pred_check_branch
      %21 = sbr.rel (0) target = $region9
    $region8: #{tpu_custom_call.1} parent=1 // pred_region
      %s23 = ssub.s32 512, 512
      %24 = vsyncadd [#allocation7], %s23
      %s25 = sshll.u32 [#allocation6], 4
      %s26 = int_to_ptr.vmem [resolvable:$true] %s25
      %31 = dma.hbm_to_vmem [thread:$0]  %s1, 512, %s26, [#allocation7], 128, 128, 8
    $region9: #{tpu_custom_call.1} parent=1 // pred_fallthru
      _
    // Predicated region
    $region10: #{tpu_custom_call.1} parent=1 // pred_check
      _
    $region11: #{tpu_custom_call.1} parent=1 // pred_check_branch
      %33 = sbr.rel (0) target = $region13
    $region12: #{tpu_custom_call.1} parent=1 // pred_region
      %34 = dma.done [#allocation4], 128
    $region13: #{tpu_custom_call.1} parent=1 // pred_fallthru
      _
    // Predicated region
    $region14: #{tpu_custom_call.1} parent=1 // pred_check
      _
    $region15: #{tpu_custom_call.1} parent=1 // pred_check_branch
      %36 = sbr.rel (0) target = $region17
    $region16: #{tpu_custom_call.1} parent=1 // pred_region
      %37 = dma.done [#allocation7], 512
    $region17: #{tpu_custom_call.1} parent=1 // pred_fallthru
      _
    %p38 = scmp.eq.s32.totalorder 0, 0
    // Predicated region
    $region18: #{tpu_custom_call.1} parent=1 // pred_check
      %p39 = pneg %p38
    $region19: #{tpu_custom_call.1} parent=1 // pred_check_branch
      %41 = sbr.rel (%p39) target = $region21
    $region20: #{tpu_custom_call.1} parent=1 // pred_region
      %v42 = vld [vmem:[#allocation6] sm:$0xff]
      %v43 = vld [vmem:[#allocation6 + $0x8] sm:$0xff]
      %v44 = vld [vmem:[#allocation6 + $0x10] sm:$0xff]
      %v45 = vld [vmem:[#allocation6 + $0x18] sm:$0xff]
      %v46 = vmul.f32 %v42, %v42
      %v47 = vmul.f32 %v43, %v43
      %v48 = vmul.f32 %v44, %v44
      %v49 = vmul.f32 %v45, %v45
      %v50 = vadd.f32 %v46, %v47
      %v51 = vadd.f32 %v50, %v48
      %v52 = vadd.f32 %v51, %v49
      %v53 = vrot.slane %v52, 4
      %v54 = vadd.f32 %v52, %v53
      %v55 = vrot.slane %v54, 2
      %v56 = vadd.f32 %v54, %v55
      %v57 = vrot.slane %v56, 1
      %v58 = vadd.f32 %v56, %v57
      %v59 = vmax.f32 %v58, 1e-24
      %v60 = vrsqrt.pop %v59
      %61 = vst [vmem:[#allocation2] sm:$0x1] %v60
    $region21: #{tpu_custom_call.1} parent=1 // pred_fallthru
      _
    %v62 = vld [vmem:[#allocation3] sm:$0xff]
    %v63 = vmul.f32 %v62, %v62
    %vm64 = vcmask 261120
    %v65 = vsel %vm64, %v63, 0.0
    %66 = vadd.xlane.f32.xlu0 %v65
    %v67 = vpop.xlane.xlu0 %66
    %v68 = vmax.f32 %v67, 1e-24
    %v69 = vrsqrt.pop %v68
    %v70 = vld [vmem:[#allocation6] sm:$0xff]
    %v71 = vld [vmem:[#allocation6 + $0x8] sm:$0xff]
    %v72 = vld [vmem:[#allocation6 + $0x10] sm:$0xff]
    %v73 = vld [vmem:[#allocation6 + $0x18] sm:$0xff]
    %v75 = vsel %vm64, %v62, 0
    %77 = vmatprep.subr.mxu0 0.0
    %78 = vmatpush1.msra.mxu0 %v70
    %79 = vmatprep.subr.mxu0 0.0
    %80 = vmatpush1.msra.mxu0 %v71
    %81 = vmatprep.subr.mxu0 0.0
    %82 = vmatpush1.msra.mxu0 %v72
    %83 = vmatprep.subr.mxu0 0.0
    %84 = vmatpush1.msra.mxu0 %v73
    %85 = vmatprep.subr.mxu0 0.0
    %86 = vmatpush1.msra.mxu0 0.0
    %87 = vmatprep.subr.mxu0 0.0
    %88 = vmatpush1.msra.mxu0 0.0
    %89 = vmatprep.subr.mxu0 0.0
    %90 = vmatpush1.msra.mxu0 0.0
    %91 = vmatprep.subr.mxu0 0.0
    %92 = vmatpush1.msra.mxu0 0.0
    %93 = vmatprep.subr.mxu0 0.0
    %94 = vmatpush1.msra.mxu0 0.0
    %95 = vmatprep.subr.mxu0 0.0
    %96 = vmatpush1.msra.mxu0 0.0
    %97 = vmatprep.subr.mxu0 0.0
    %98 = vmatpush1.msra.mxu0 0.0
    %99 = vmatprep.subr.mxu0 0.0
    %100 = vmatpush1.msra.mxu0 0.0
    %101 = vmatprep.subr.mxu0 0.0
    %102 = vmatpush1.msra.mxu0 0.0
    %103 = vmatprep.subr.mxu0 0.0
    %104 = vmatpush1.msra.mxu0 0.0
    %105 = vmatprep.subr.mxu0 0.0
    %106 = vmatpush1.msra.mxu0 0.0
    %107 = vmatprep.subr.mxu0 0.0
    %108 = vmatpush1.msra.mxu0 0.0
    %109 = vmatprep.subr.mxu0 0.0
    %110 = vmatpush1.msra.mxu0 0.0
    %111 = vmatprep.subr.mxu0 0.0
    %112 = vmatpush1.msra.mxu0 0.0
    %113 = vmatprep.subr.mxu0 0.0
    %114 = vmatpush1.msra.mxu0 0.0
    %115 = vmatprep.subr.mxu0 0.0
    %116 = vmatpush1.msra.mxu0 0.0
    %117 = vmatprep.subr.mxu0 0.0
    %118 = vmatpush1.msra.mxu0 0.0
    %119 = vmatprep.subr.mxu0 0.0
    %120 = vmatpush1.msra.mxu0 0.0
    %121 = vmatprep.subr.mxu0 0.0
    %122 = vmatpush1.msra.mxu0 0.0
    %123 = vmatprep.subr.mxu0 0.0
    %124 = vmatpush1.msra.mxu0 0.0
    %125 = vmatprep.subr.mxu0 0.0
    %126 = vmatpush1.msra.mxu0 0.0
    %127 = vmatprep.subr.mxu0 0.0
    %128 = vmatpush1.msra.mxu0 0.0
    %129 = vmatprep.subr.mxu0 0.0
    %130 = vmatpush1.msra.mxu0 0.0
    %131 = vmatprep.subr.mxu0 0.0
    %132 = vmatpush1.msra.mxu0 0.0
    %133 = vmatprep.subr.mxu0 0.0
    %134 = vmatpush1.msra.mxu0 0.0
    %135 = vmatprep.subr.mxu0 0.0
    %136 = vmatpush1.msra.mxu0 0.0
    %137 = vmatprep.subr.mxu0 0.0
    %138 = vmatpush1.msra.mxu0 0.0
    %139 = vmatprep.subr.mxu0 0.0
    %140 = vmatpush1.msra.mxu0 0.0
    %141 = vmatprep.mubr.f32.mxu0 0.0
    %142 = vmatmul.mubr.f32.gmra.mrb[0].mxu0 %v75
    %v143 = vpop.f32.mrb[0].mxu0
    %v144 = vadd.f32 0.0, %v143
    %v145 = vpop.f32.mrb[0].mxu0
    %146 = vdwg.mxu0
    %v147 = vmul.f32 %v144, %v69
    %v148 = vld [vmem:[#allocation2] sm:$0x1]
    %v150 = vlaneseq
    %v151 = vshrl.u32 %v150, 7
    %v152 = vsub.s32 0, %v151
    %v153 = vrot.slane %v148, %v152
    %v155 = vmul.f32 %v147, %v153
    %156 = vst [vmem:[#allocation8] sm:$0xff] %v155
    // Predicated region
    $region22: #{tpu_custom_call.1} parent=1 // pred_check
      _
    $region23: #{tpu_custom_call.1} parent=1 // pred_check_branch
      %158 = sbr.rel (0) target = $region25
    $region24: #{tpu_custom_call.1} parent=1 // pred_region
      %s160 = ssub.s32 128, 128
      %161 = vsyncadd [#allocation5], %s160
      %s163 = sshll.u32 [#allocation8], 4
      %s164 = int_to_ptr.vmem [resolvable:$true] %s163
      %166 = dma.vmem_to_hbm [thread:$0]  %s164, 128, %s2, [#allocation5]
    $region25: #{tpu_custom_call.1} parent=1 // pred_fallthru
      _
    // Predicated region
    $region26: #{tpu_custom_call.1} parent=1 // pred_check
      _
    $region27: #{tpu_custom_call.1} parent=1 // pred_check_branch
      %168 = sbr.rel (0) target = $region29
    $region28: #{tpu_custom_call.1} parent=1 // pred_region
      %169 = dma.done [#allocation5], 128
    $region29: #{tpu_custom_call.1} parent=1 // pred_fallthru
      _
    %170 = vsyncpa [#allocation4], 1
    %171 = vsyncpa [#allocation7], 1
    %172 = vsyncpa [#allocation5], 1

</llo_original>
